<compile_context>
chip_gen: v7x
topology: tpu7x:2x2x1
jax: 0.10.0
libtpu: 0.0.40
codegen_flags: <defaults>
</compile_context>

<pallas_src>
import functools

import numpy as np
import jax
import jax.numpy as jnp
from jax.experimental import pallas as pl
from jax.experimental.pallas import tpu as pltpu


LANES = 128
_MAX_BLOCK_BYTES = 4 << 20      # per-grid-step resident bytes cap (x + out + init + mask)
_MIN_SPLIT_BYTES = 512 * 1024   # only split into >=4 steps if each step stays DMA-sized


def _pick_tile_rows(rows_per_c, per_row_bytes):
    """Tile size S (sublane rows) along the per-channel spatial-row axis.

    Candidates are multiples of 8 dividing rows_per_c plus the full extent (always a
    legal block dim).  Prefer the largest candidate that (a) fits the byte cap and
    (b) still yields >= 4 grid steps with >= _MIN_SPLIT_BYTES per step (so DMA is
    pipelined and both v7x TensorCores get >= 2 steps); small problems fall back to
    one big block (per-step overhead dominates any split there)."""
    cands = [d for d in range(8, rows_per_c + 1, 8) if rows_per_c % d == 0]
    cands.append(rows_per_c)
    cands = sorted(set(cands))
    fitting = [d for d in cands if d * per_row_bytes <= _MAX_BLOCK_BYTES] or [cands[0]]
    for d in reversed(fitting):                      # largest first
        if rows_per_c // d >= 4 and d * per_row_bytes >= _MIN_SPLIT_BYTES:
            return d
    return fitting[-1]


def _cfg_fused_kernel(A_ref, bias_ref, x_ref, *rest, B, C, binit, has_mask):
    """Fused inner-model + CFG combine (+ optional inpainting mask blend).

    A_ref    : SMEM (B*B,)  f32   folded latent-mixing weights (c_skip + CFG).
    bias_ref : SMEM (B*C,)  f32   folded per-(row, channel) inner-model bias.
    x_ref    : VMEM (B, C, S, 128)       latent tile, native dtype.
    rest     : [init_ref (binit, C, S, 128), mask_ref (S, 128) f32,]  out (B, C, S, 128).
    """
    if has_mask:
        init_ref, mask_ref, o_ref = rest
        m = mask_ref[...]
        nm = 1.0 - m                       # nmask computed in-kernel; never read from HBM
    else:
        (o_ref,) = rest

    for cc in range(C):                    # static unroll: channel sub-blocks of the tile
        for i in range(B):                 # static unroll: output rows
            acc = x_ref[0, cc].astype(jnp.float32) * A_ref[i * B]
            for b in range(1, B):          # scalar*tile FMAs (VPU), SMEM scalar weights
                acc = acc + x_ref[b, cc].astype(jnp.float32) * A_ref[i * B + b]
            acc = acc + bias_ref[i * C + cc]
            if has_mask:
                ii = 0 if binit == 1 else i
                acc = init_ref[ii, cc].astype(jnp.float32) * m + nm * acc
            o_ref[i, cc] = acc.astype(o_ref.dtype)


@functools.lru_cache(maxsize=None)
def _build_cfg_denoise_fn(B, C, H, W, ncond, src, has_mask, x_dtype, init_dtype, binit):
    """Build (and cache) the jitted fused denoise step for one static structure."""
    HW = H * W
    CHW = C * HW
    # TODO(synk): H*W not a multiple of 128 lanes would need padded/masked tail tiles.
    assert HW % LANES == 0, "H*W must be a multiple of 128"
    rows_per_c = HW // LANES                          # spatial rows per channel
    x_isz = np.dtype(x_dtype).itemsize
    init_isz = np.dtype(init_dtype).itemsize if has_mask else 0

    per_row_bytes = 2 * B * C * LANES * x_isz         # x + out
    if has_mask:
        per_row_bytes += binit * C * LANES * init_isz # init_latent
        per_row_bytes += LANES * 4                    # mask (f32)
    S = _pick_tile_rows(rows_per_c, per_row_bytes)
    num_tiles = rows_per_c // S
    block_bytes = S * per_row_bytes

    # Static host constants for the A-matrix fold.
    src_idx = np.asarray(src, np.int32)
    src_onehot = np.zeros((ncond, B), np.float32)
    for j, b in enumerate(src):
        src_onehot[j, b] = 1.0

    kernel = functools.partial(_cfg_fused_kernel, B=B, C=C, binit=binit,
                               has_mask=has_mask)

    lat_spec = pl.BlockSpec((B, C, S, LANES), lambda t, A, bias: (0, 0, t, 0))
    in_specs = [lat_spec]                                                  # x (native dtype)
    if has_mask:
        in_specs += [
            pl.BlockSpec((binit, C, S, LANES), lambda t, A, bias: (0, 0, t, 0)),  # init
            pl.BlockSpec((S, LANES), lambda t, A, bias: (t, 0)),                  # mask rows
        ]

    flops = (2 * B + 1 + (3 if has_mask else 0)) * B * CHW
    bytes_accessed = 2 * B * CHW * x_isz
    if has_mask:
        bytes_accessed += binit * CHW * init_isz + num_tiles * S * LANES * 4

    fused = pl.pallas_call(
        kernel,
        out_shape=jax.ShapeDtypeStruct((B, C, rows_per_c, LANES), x_dtype),
        grid_spec=pltpu.PrefetchScalarGridSpec(
            num_scalar_prefetch=2,              # A matrix + folded bias -> SMEM
            grid=(num_tiles,),
            in_specs=in_specs,
            out_specs=lat_spec,
        ),
        compiler_params=pltpu.CompilerParams(
            dimension_semantics=("parallel",),
            vmem_limit_bytes=int(min(48 << 20, max(6 * block_bytes, 16 << 20))),
        ),
        cost_estimate=pl.CostEstimate(flops=flops, transcendentals=0,
                                      bytes_accessed=bytes_accessed),
    )

    def run(x, sigma, tensor, uncond, w, wflat, *mask_args):
        f32 = jnp.float32
        sigma = sigma.astype(f32)
        cskip = jax.lax.rsqrt(sigma * sigma + 1.0)                       # (B,)
        wmat = wflat.astype(f32).reshape(B, ncond)
        u_factor = 1.0 - jnp.sum(wmat, axis=1)                           # 1 - rowsum(W)
        # Folded latent-mixing matrix:
        #   A[i,b] = c_skip[i]*u_factor[i]*delta_ib + sum_{j: src[j]=b} w[i,j]*c_skip[b]
        cskip_src = cskip[src_idx]                                       # (ncond,)
        A = (wmat * cskip_src[None, :]) @ jnp.asarray(src_onehot)        # (B, B)
        A = A + jnp.diag(cskip * u_factor)
        # Hoisted inner-model bias, folded with the CFG weights: (B, C) scalars.
        wf = w.astype(f32)
        bias_cond = jnp.mean(tensor.astype(f32), axis=1) @ wf            # (ncond, C)
        bias_unc = jnp.mean(uncond.astype(f32), axis=1) @ wf             # (B, C)
        bias = u_factor[:, None] * bias_unc + wmat @ bias_cond           # (B, C)

        x4 = x.reshape(B, C, rows_per_c, LANES)        # native dtype, no upcast copy
        args = [A.reshape(-1), bias.reshape(-1), x4]
        if has_mask:
            init_latent, mask = mask_args
            args.append(init_latent.reshape(binit, C, rows_per_c, LANES))  # native dtype
            args.append(mask.astype(f32).reshape(rows_per_c, LANES))       # spatial plane
        out4 = fused(*args)
        return out4.reshape(B, C, H, W)

    return jax.jit(run)


class SyntheticInnerModel:
    """Deterministic k-diffusion-style denoiser used as the CFGDenoiser inner model:
         out[b] = x[b] * rsqrt(sigma[b]^2 + 1) + (mean_t cond[b]) @ w   (per-channel bias)
    Its parameter `w` is consumed directly by the fused CFG kernel; the pure-JAX
    __call__ exists only for standalone/reference use."""

    def __init__(self, w):
        self.w = w                        # (D, C)

    def __call__(self, x, sigma, cond):
        c_skip = jax.lax.rsqrt(sigma.astype(jnp.float32) ** 2 + 1.0)
        bias = jnp.mean(cond, axis=1) @ self.w
        return x * c_skip[:, None, None, None] + bias[:, :, None, None]


class CFGDenoiser:
    """JAX/Pallas port of the stable-diffusion-webui CFGDenoiser forward pass."""

    def __init__(self, model):
        self.inner_model = model
        self.mask = None
        self.nmask = None                 # kept for API parity (see TODO below)
        self.init_latent = None
        self.step = 0

    def __call__(self, x, sigma, uncond, cond, cond_scale):
        # `cond` is the already-reconstructed (conds_list, tensor) pair and `uncond`
        # the already-reconstructed uncond tensor (see prompt_parser TODO above).
        conds_list, tensor = cond
        batch_size = len(conds_list)
        repeats = [len(conds_list[i]) for i in range(batch_size)]

        # x_out row -> source latent row.  Replaces the torch cat/stack duplication of
        # x_in / sigma_in: nothing is materialized in HBM, the fold below reads each
        # source row straight out of the resident latent tile.
        src = tuple(i for i, n in enumerate(repeats) for _ in range(n))
        ncond = len(src)
        assert tensor.shape[0] == ncond

        # Dense CFG weight matrix (flattened).  Values flow through SMEM as data, so
        # weight / cond_scale changes never retrace — only structural changes do.
        wflat = np.zeros((batch_size * ncond,), np.float32)
        for i, conds in enumerate(conds_list):
            for cond_index, weight in conds:
                wflat[i * ncond + cond_index] += weight * cond_scale

        # NOTE: the torch else-branch (tensor.shape[1] != uncond.shape[1]) only exists
        # because differing token counts cannot be batched through the inner model; with
        # the conditioning projection hoisted out of the kernel, cond and uncond are
        # always evaluated from their own tensors, so both branches coincide here.
        B, C, H, W = x.shape
        has_mask = self.mask is not None
        binit = int(self.init_latent.shape[0]) if has_mask else 0
        init_dtype = self.init_latent.dtype if has_mask else None
        run = _build_cfg_denoise_fn(B, C, H, W, ncond, src, has_mask,
                                    x.dtype, init_dtype, binit)

        if has_mask:
            # TODO(synk): the kernel computes nmask = 1 - mask in-registers (true for
            # webui's processing.py); an arbitrary self.nmask would need its own stream.
            denoised = run(x, sigma, tensor, uncond, self.inner_model.w,
                           jnp.asarray(wflat), self.init_latent, self.mask)
        else:
            denoised = run(x, sigma, tensor, uncond, self.inner_model.w,
                           jnp.asarray(wflat))

        self.step += 1
        return denoised


# ----------------------------------------------------------------------------
# Pure-JAX reference (mirrors the PyTorch forward literally)
# ----------------------------------------------------------------------------
def _reference(x, sigma, uncond, conds_list, tensor, cond_scale, w,
               init_latent=None, mask=None, nmask=None):
    def inner_ref(xx, ss, cc):
        c = 1.0 / jnp.sqrt(ss ** 2 + 1.0)
        bias = jnp.mean(cc, axis=1) @ w
        return xx * c[:, None, None, None] + bias[:, :, None, None]

    repeats = [len(c) for c in conds_list]
    x_in = jnp.concatenate(
        [jnp.stack([x[i]] * n) for i, n in enumerate(repeats)] + [x])
    s_in = jnp.concatenate(
        [jnp.stack([sigma[i]] * n) for i, n in enumerate(repeats)] + [sigma])
    cond_in = jnp.concatenate([tensor, uncond])
    x_out = inner_ref(x_in, s_in, cond_in)
    denoised_uncond = x_out[-uncond.shape[0]:]
    denoised = denoised_uncond
    for i, conds in enumerate(conds_list):
        for cond_index, weight in conds:
            upd = (x_out[cond_index] - denoised_uncond[i]) * (weight * cond_scale)
            denoised = denoised.at[i].add(upd)
    if mask is not None:
        denoised = init_latent * mask + nmask * denoised
    return denoised


if __name__ == "__main__":
    B, C, H, W = 2, 4, 16, 16
    T, D = 8, 32

    key = jax.random.PRNGKey(0)
    k1, k2, k3, k4, k5, k6, k7 = jax.random.split(key, 7)
    x = jax.random.normal(k1, (B, C, H, W), jnp.float32)
    sigma = jnp.abs(jax.random.normal(k2, (B,), jnp.float32)) + 0.5
    tensor = jax.random.normal(k3, (B, T, D), jnp.float32)       # positive conds
    uncond = jax.random.normal(k4, (B, T, D), jnp.float32)
    w_proj = jax.random.normal(k5, (D, C), jnp.float32) * 0.1    # synthetic model weight

    conds_list = [[(0, 1.0)], [(1, 0.8)]]
    cond_scale = 7.5

    model = SyntheticInnerModel(w_proj)
    denoiser = CFGDenoiser(model)

    # --- plain CFG path (mask is None), f32 latents ---
    out = denoiser(x, sigma, uncond, (conds_list, tensor), cond_scale)
    out = jax.block_until_ready(out)
    assert out.shape == (B, C, H, W) and out.dtype == x.dtype
    ref = _reference(x, sigma, uncond, conds_list, tensor, cond_scale, w_proj)
    np.testing.assert_allclose(np.asarray(out), np.asarray(ref), rtol=2e-3, atol=2e-3)

    # --- inpainting path (mask blend fused into the same kernel, nmask in-kernel) ---
    init_latent = jax.random.normal(k6, (B, C, H, W), jnp.float32)
    mask = (jax.random.uniform(k7, (1, 1, H, W)) > 0.5).astype(jnp.float32)
    nmask = 1.0 - mask
    denoiser.init_latent = init_latent
    denoiser.mask = mask
    denoiser.nmask = nmask
    out_m = denoiser(x, sigma, uncond, (conds_list, tensor), cond_scale)
    out_m = jax.block_until_ready(out_m)
    ref_m = _reference(x, sigma, uncond, conds_list, tensor, cond_scale, w_proj,
                       init_latent=init_latent, mask=mask, nmask=nmask)
    np.testing.assert_allclose(np.asarray(out_m), np.asarray(ref_m), rtol=2e-3, atol=2e-3)

    # --- native-dtype path: bf16 latents stream without a wrapper-side f32 upcast ---
    x_bf = x.astype(jnp.bfloat16)
    denoiser_bf = CFGDenoiser(model)
    out_bf = denoiser_bf(x_bf, sigma, uncond, (conds_list, tensor), cond_scale)
    out_bf = jax.block_until_ready(out_bf)
    assert out_bf.dtype == jnp.bfloat16
    ref_bf = _reference(x_bf.astype(jnp.float32), sigma, uncond, conds_list, tensor,
                        cond_scale, w_proj)
    np.testing.assert_allclose(np.asarray(out_bf.astype(jnp.float32)),
                               np.asarray(ref_bf), rtol=2e-2, atol=2e-2)

    print("KERNEL_OK")
</pallas_src>

<mosaic_0001>
module attributes {stable_mosaic.version = 11 : i64} {
  func.func @_cfg_fused_kernel(%arg0: i32, %arg1: memref<4xf32, #tpu.memory_space<smem>>, %arg2: memref<8xf32, #tpu.memory_space<smem>>, %arg3: memref<2x4x2x128xf32, #tpu.memory_space<vmem>>, %arg4: memref<2x4x2x128xf32, #tpu.memory_space<vmem>>) attributes {dimension_semantics = [#tpu.dimension_semantics<parallel>], iteration_bounds = array<i64: 1>, scalar_prefetch = 2 : i64, scratch_operands = 0 : i64, tpu.core_type = #tpu.core_type<tc>, window_params = [{transform_indices = @transform_0, window_bounds = array<i64: 2, 4, 2, 128>}, {transform_indices = @transform_1, window_bounds = array<i64: 2, 4, 2, 128>}]} {
    %c0 = arith.constant 0 : index
    %c0_0 = arith.constant 0 : index
    %c0_1 = arith.constant 0 : index
    %c0_2 = arith.constant 0 : index
    %0 = vector.load %arg3[%c0, %c0_0, %c0_1, %c0_2] : memref<2x4x2x128xf32, #tpu.memory_space<vmem>>, vector<1x1x2x128xf32>
    %1 = vector.shape_cast %0 : vector<1x1x2x128xf32> to vector<2x128xf32>
    %c0_3 = arith.constant 0 : index
    %2 = memref.load %arg1[%c0_3] : memref<4xf32, #tpu.memory_space<smem>>
    %3 = vector.broadcast %2 : f32 to vector<2x128xf32>
    %4 = arith.mulf %1, %3 : vector<2x128xf32>
    %c1 = arith.constant 1 : index
    %c0_4 = arith.constant 0 : index
    %c0_5 = arith.constant 0 : index
    %c0_6 = arith.constant 0 : index
    %5 = vector.load %arg3[%c1, %c0_4, %c0_5, %c0_6] : memref<2x4x2x128xf32, #tpu.memory_space<vmem>>, vector<1x1x2x128xf32>
    %6 = vector.shape_cast %5 : vector<1x1x2x128xf32> to vector<2x128xf32>
    %c1_7 = arith.constant 1 : index
    %7 = memref.load %arg1[%c1_7] : memref<4xf32, #tpu.memory_space<smem>>
    %8 = vector.broadcast %7 : f32 to vector<2x128xf32>
    %9 = arith.mulf %6, %8 : vector<2x128xf32>
    %10 = arith.addf %4, %9 : vector<2x128xf32>
    %c0_8 = arith.constant 0 : index
    %11 = memref.load %arg2[%c0_8] : memref<8xf32, #tpu.memory_space<smem>>
    %12 = vector.broadcast %11 : f32 to vector<2x128xf32>
    %13 = arith.addf %10, %12 : vector<2x128xf32>
    %c0_9 = arith.constant 0 : index
    %c0_10 = arith.constant 0 : index
    %c0_11 = arith.constant 0 : index
    %c0_12 = arith.constant 0 : index
    %14 = vector.load %arg4[%c0_9, %c0_10, %c0_11, %c0_12] : memref<2x4x2x128xf32, #tpu.memory_space<vmem>>, vector<1x1x2x128xf32>
    %15 = vector.shape_cast %14 : vector<1x1x2x128xf32> to vector<2x128xf32>
    %16 = vector.shape_cast %13 : vector<2x128xf32> to vector<1x1x2x128xf32>
    tpu.vector_store %arg4[%c0_9, %c0_10, %c0_11, %c0_12], %16 {strides = array<i32>} : memref<2x4x2x128xf32, #tpu.memory_space<vmem>>, vector<1x1x2x128xf32>,
    %c0_13 = arith.constant 0 : index
    %c0_14 = arith.constant 0 : index
    %c0_15 = arith.constant 0 : index
    %c0_16 = arith.constant 0 : index
    %17 = vector.load %arg3[%c0_13, %c0_14, %c0_15, %c0_16] : memref<2x4x2x128xf32, #tpu.memory_space<vmem>>, vector<1x1x2x128xf32>
    %18 = vector.shape_cast %17 : vector<1x1x2x128xf32> to vector<2x128xf32>
    %c2 = arith.constant 2 : index
    %19 = memref.load %arg1[%c2] : memref<4xf32, #tpu.memory_space<smem>>
    %20 = vector.broadcast %19 : f32 to vector<2x128xf32>
    %21 = arith.mulf %18, %20 : vector<2x128xf32>
    %c1_17 = arith.constant 1 : index
    %c0_18 = arith.constant 0 : index
    %c0_19 = arith.constant 0 : index
    %c0_20 = arith.constant 0 : index
    %22 = vector.load %arg3[%c1_17, %c0_18, %c0_19, %c0_20] : memref<2x4x2x128xf32, #tpu.memory_space<vmem>>, vector<1x1x2x128xf32>
    %23 = vector.shape_cast %22 : vector<1x1x2x128xf32> to vector<2x128xf32>
    %c3 = arith.constant 3 : index
    %24 = memref.load %arg1[%c3] : memref<4xf32, #tpu.memory_space<smem>>
    %25 = vector.broadcast %24 : f32 to vector<2x128xf32>
    %26 = arith.mulf %23, %25 : vector<2x128xf32>
    %27 = arith.addf %21, %26 : vector<2x128xf32>
    %c4 = arith.constant 4 : index
    %28 = memref.load %arg2[%c4] : memref<8xf32, #tpu.memory_space<smem>>
    %29 = vector.broadcast %28 : f32 to vector<2x128xf32>
    %30 = arith.addf %27, %29 : vector<2x128xf32>
    %c1_21 = arith.constant 1 : index
    %c0_22 = arith.constant 0 : index
    %c0_23 = arith.constant 0 : index
    %c0_24 = arith.constant 0 : index
    %31 = vector.load %arg4[%c1_21, %c0_22, %c0_23, %c0_24] : memref<2x4x2x128xf32, #tpu.memory_space<vmem>>, vector<1x1x2x128xf32>
    %32 = vector.shape_cast %31 : vector<1x1x2x128xf32> to vector<2x128xf32>
    %33 = vector.shape_cast %30 : vector<2x128xf32> to vector<1x1x2x128xf32>
    tpu.vector_store %arg4[%c1_21, %c0_22, %c0_23, %c0_24], %33 {strides = array<i32>} : memref<2x4x2x128xf32, #tpu.memory_space<vmem>>, vector<1x1x2x128xf32>,
    %c0_25 = arith.constant 0 : index
    %c1_26 = arith.constant 1 : index
    %c0_27 = arith.constant 0 : index
    %c0_28 = arith.constant 0 : index
    %34 = vector.load %arg3[%c0_25, %c1_26, %c0_27, %c0_28] : memref<2x4x2x128xf32, #tpu.memory_space<vmem>>, vector<1x1x2x128xf32>
    %35 = vector.shape_cast %34 : vector<1x1x2x128xf32> to vector<2x128xf32>
    %c0_29 = arith.constant 0 : index
    %36 = memref.load %arg1[%c0_29] : memref<4xf32, #tpu.memory_space<smem>>
    %37 = vector.broadcast %36 : f32 to vector<2x128xf32>
    %38 = arith.mulf %35, %37 : vector<2x128xf32>
    %c1_30 = arith.constant 1 : index
    %c1_31 = arith.constant 1 : index
    %c0_32 = arith.constant 0 : index
    %c0_33 = arith.constant 0 : index
    %39 = vector.load %arg3[%c1_30, %c1_31, %c0_32, %c0_33] : memref<2x4x2x128xf32, #tpu.memory_space<vmem>>, vector<1x1x2x128xf32>
    %40 = vector.shape_cast %39 : vector<1x1x2x128xf32> to vector<2x128xf32>
    %c1_34 = arith.constant 1 : index
    %41 = memref.load %arg1[%c1_34] : memref<4xf32, #tpu.memory_space<smem>>
    %42 = vector.broadcast %41 : f32 to vector<2x128xf32>
    %43 = arith.mulf %40, %42 : vector<2x128xf32>
    %44 = arith.addf %38, %43 : vector<2x128xf32>
    %c1_35 = arith.constant 1 : index
    %45 = memref.load %arg2[%c1_35] : memref<8xf32, #tpu.memory_space<smem>>
    %46 = vector.broadcast %45 : f32 to vector<2x128xf32>
    %47 = arith.addf %44, %46 : vector<2x128xf32>
    %c0_36 = arith.constant 0 : index
    %c1_37 = arith.constant 1 : index
    %c0_38 = arith.constant 0 : index
    %c0_39 = arith.constant 0 : index
    %48 = vector.load %arg4[%c0_36, %c1_37, %c0_38, %c0_39] : memref<2x4x2x128xf32, #tpu.memory_space<vmem>>, vector<1x1x2x128xf32>
    %49 = vector.shape_cast %48 : vector<1x1x2x128xf32> to vector<2x128xf32>
    %50 = vector.shape_cast %47 : vector<2x128xf32> to vector<1x1x2x128xf32>
    tpu.vector_store %arg4[%c0_36, %c1_37, %c0_38, %c0_39], %50 {strides = array<i32>} : memref<2x4x2x128xf32, #tpu.memory_space<vmem>>, vector<1x1x2x128xf32>,
    %c0_40 = arith.constant 0 : index
    %c1_41 = arith.constant 1 : index
    %c0_42 = arith.constant 0 : index
    %c0_43 = arith.constant 0 : index
    %51 = vector.load %arg3[%c0_40, %c1_41, %c0_42, %c0_43] : memref<2x4x2x128xf32, #tpu.memory_space<vmem>>, vector<1x1x2x128xf32>
    %52 = vector.shape_cast %51 : vector<1x1x2x128xf32> to vector<2x128xf32>
    %c2_44 = arith.constant 2 : index
    %53 = memref.load %arg1[%c2_44] : memref<4xf32, #tpu.memory_space<smem>>
    %54 = vector.broadcast %53 : f32 to vector<2x128xf32>
    %55 = arith.mulf %52, %54 : vector<2x128xf32>
    %c1_45 = arith.constant 1 : index
    %c1_46 = arith.constant 1 : index
    %c0_47 = arith.constant 0 : index
    %c0_48 = arith.constant 0 : index
    %56 = vector.load %arg3[%c1_45, %c1_46, %c0_47, %c0_48] : memref<2x4x2x128xf32, #tpu.memory_space<vmem>>, vector<1x1x2x128xf32>
    %57 = vector.shape_cast %56 : vector<1x1x2x128xf32> to vector<2x128xf32>
    %c3_49 = arith.constant 3 : index
    %58 = memref.load %arg1[%c3_49] : memref<4xf32, #tpu.memory_space<smem>>
    %59 = vector.broadcast %58 : f32 to vector<2x128xf32>
    %60 = arith.mulf %57, %59 : vector<2x128xf32>
    %61 = arith.addf %55, %60 : vector<2x128xf32>
    %c5 = arith.constant 5 : index
    %62 = memref.load %arg2[%c5] : memref<8xf32, #tpu.memory_space<smem>>
    %63 = vector.broadcast %62 : f32 to vector<2x128xf32>
    %64 = arith.addf %61, %63 : vector<2x128xf32>
    %c1_50 = arith.constant 1 : index
    %c1_51 = arith.constant 1 : index
    %c0_52 = arith.constant 0 : index
    %c0_53 = arith.constant 0 : index
    %65 = vector.load %arg4[%c1_50, %c1_51, %c0_52, %c0_53] : memref<2x4x2x128xf32, #tpu.memory_space<vmem>>, vector<1x1x2x128xf32>
    %66 = vector.shape_cast %65 : vector<1x1x2x128xf32> to vector<2x128xf32>
    %67 = vector.shape_cast %64 : vector<2x128xf32> to vector<1x1x2x128xf32>
    tpu.vector_store %arg4[%c1_50, %c1_51, %c0_52, %c0_53], %67 {strides = array<i32>} : memref<2x4x2x128xf32, #tpu.memory_space<vmem>>, vector<1x1x2x128xf32>,
    %c0_54 = arith.constant 0 : index
    %c2_55 = arith.constant 2 : index
    %c0_56 = arith.constant 0 : index
    %c0_57 = arith.constant 0 : index
    %68 = vector.load %arg3[%c0_54, %c2_55, %c0_56, %c0_57] : memref<2x4x2x128xf32, #tpu.memory_space<vmem>>, vector<1x1x2x128xf32>
    %69 = vector.shape_cast %68 : vector<1x1x2x128xf32> to vector<2x128xf32>
    %c0_58 = arith.constant 0 : index
    %70 = memref.load %arg1[%c0_58] : memref<4xf32, #tpu.memory_space<smem>>
    %71 = vector.broadcast %70 : f32 to vector<2x128xf32>
    %72 = arith.mulf %69, %71 : vector<2x128xf32>
    %c1_59 = arith.constant 1 : index
    %c2_60 = arith.constant 2 : index
    %c0_61 = arith.constant 0 : index
    %c0_62 = arith.constant 0 : index
    %73 = vector.load %arg3[%c1_59, %c2_60, %c0_61, %c0_62] : memref<2x4x2x128xf32, #tpu.memory_space<vmem>>, vector<1x1x2x128xf32>
    %74 = vector.shape_cast %73 : vector<1x1x2x128xf32> to vector<2x128xf32>
    %c1_63 = arith.constant 1 : index
    %75 = memref.load %arg1[%c1_63] : memref<4xf32, #tpu.memory_space<smem>>
    %76 = vector.broadcast %75 : f32 to vector<2x128xf32>
    %77 = arith.mulf %74, %76 : vector<2x128xf32>
    %78 = arith.addf %72, %77 : vector<2x128xf32>
    %c2_64 = arith.constant 2 : index
    %79 = memref.load %arg2[%c2_64] : memref<8xf32, #tpu.memory_space<smem>>
    %80 = vector.broadcast %79 : f32 to vector<2x128xf32>
    %81 = arith.addf %78, %80 : vector<2x128xf32>
    %c0_65 = arith.constant 0 : index
    %c2_66 = arith.constant 2 : index
    %c0_67 = arith.constant 0 : index
    %c0_68 = arith.constant 0 : index
    %82 = vector.load %arg4[%c0_65, %c2_66, %c0_67, %c0_68] : memref<2x4x2x128xf32, #tpu.memory_space<vmem>>, vector<1x1x2x128xf32>
    %83 = vector.shape_cast %82 : vector<1x1x2x128xf32> to vector<2x128xf32>
    %84 = vector.shape_cast %81 : vector<2x128xf32> to vector<1x1x2x128xf32>
    tpu.vector_store %arg4[%c0_65, %c2_66, %c0_67, %c0_68], %84 {strides = array<i32>} : memref<2x4x2x128xf32, #tpu.memory_space<vmem>>, vector<1x1x2x128xf32>,
    %c0_69 = arith.constant 0 : index
    %c2_70 = arith.constant 2 : index
    %c0_71 = arith.constant 0 : index
    %c0_72 = arith.constant 0 : index
    %85 = vector.load %arg3[%c0_69, %c2_70, %c0_71, %c0_72] : memref<2x4x2x128xf32, #tpu.memory_space<vmem>>, vector<1x1x2x128xf32>
    %86 = vector.shape_cast %85 : vector<1x1x2x128xf32> to vector<2x128xf32>
    %c2_73 = arith.constant 2 : index
    %87 = memref.load %arg1[%c2_73] : memref<4xf32, #tpu.memory_space<smem>>
    %88 = vector.broadcast %87 : f32 to vector<2x128xf32>
    %89 = arith.mulf %86, %88 : vector<2x128xf32>
    %c1_74 = arith.constant 1 : index
    %c2_75 = arith.constant 2 : index
    %c0_76 = arith.constant 0 : index
    %c0_77 = arith.constant 0 : index
    %90 = vector.load %arg3[%c1_74, %c2_75, %c0_76, %c0_77] : memref<2x4x2x128xf32, #tpu.memory_space<vmem>>, vector<1x1x2x128xf32>
    %91 = vector.shape_cast %90 : vector<1x1x2x128xf32> to vector<2x128xf32>
    %c3_78 = arith.constant 3 : index
    %92 = memref.load %arg1[%c3_78] : memref<4xf32, #tpu.memory_space<smem>>
    %93 = vector.broadcast %92 : f32 to vector<2x128xf32>
    %94 = arith.mulf %91, %93 : vector<2x128xf32>
    %95 = arith.addf %89, %94 : vector<2x128xf32>
    %c6 = arith.constant 6 : index
    %96 = memref.load %arg2[%c6] : memref<8xf32, #tpu.memory_space<smem>>
    %97 = vector.broadcast %96 : f32 to vector<2x128xf32>
    %98 = arith.addf %95, %97 : vector<2x128xf32>
    %c1_79 = arith.constant 1 : index
    %c2_80 = arith.constant 2 : index
    %c0_81 = arith.constant 0 : index
    %c0_82 = arith.constant 0 : index
    %99 = vector.load %arg4[%c1_79, %c2_80, %c0_81, %c0_82] : memref<2x4x2x128xf32, #tpu.memory_space<vmem>>, vector<1x1x2x128xf32>
    %100 = vector.shape_cast %99 : vector<1x1x2x128xf32> to vector<2x128xf32>
    %101 = vector.shape_cast %98 : vector<2x128xf32> to vector<1x1x2x128xf32>
    tpu.vector_store %arg4[%c1_79, %c2_80, %c0_81, %c0_82], %101 {strides = array<i32>} : memref<2x4x2x128xf32, #tpu.memory_space<vmem>>, vector<1x1x2x128xf32>,
    %c0_83 = arith.constant 0 : index
    %c3_84 = arith.constant 3 : index
    %c0_85 = arith.constant 0 : index
    %c0_86 = arith.constant 0 : index
    %102 = vector.load %arg3[%c0_83, %c3_84, %c0_85, %c0_86] : memref<2x4x2x128xf32, #tpu.memory_space<vmem>>, vector<1x1x2x128xf32>
    %103 = vector.shape_cast %102 : vector<1x1x2x128xf32> to vector<2x128xf32>
    %c0_87 = arith.constant 0 : index
    %104 = memref.load %arg1[%c0_87] : memref<4xf32, #tpu.memory_space<smem>>
    %105 = vector.broadcast %104 : f32 to vector<2x128xf32>
    %106 = arith.mulf %103, %105 : vector<2x128xf32>
    %c1_88 = arith.constant 1 : index
    %c3_89 = arith.constant 3 : index
    %c0_90 = arith.constant 0 : index
    %c0_91 = arith.constant 0 : index
    %107 = vector.load %arg3[%c1_88, %c3_89, %c0_90, %c0_91] : memref<2x4x2x128xf32, #tpu.memory_space<vmem>>, vector<1x1x2x128xf32>
    %108 = vector.shape_cast %107 : vector<1x1x2x128xf32> to vector<2x128xf32>
    %c1_92 = arith.constant 1 : index
    %109 = memref.load %arg1[%c1_92] : memref<4xf32, #tpu.memory_space<smem>>
    %110 = vector.broadcast %109 : f32 to vector<2x128xf32>
    %111 = arith.mulf %108, %110 : vector<2x128xf32>
    %112 = arith.addf %106, %111 : vector<2x128xf32>
    %c3_93 = arith.constant 3 : index
    %113 = memref.load %arg2[%c3_93] : memref<8xf32, #tpu.memory_space<smem>>
    %114 = vector.broadcast %113 : f32 to vector<2x128xf32>
    %115 = arith.addf %112, %114 : vector<2x128xf32>
    %c0_94 = arith.constant 0 : index
    %c3_95 = arith.constant 3 : index
    %c0_96 = arith.constant 0 : index
    %c0_97 = arith.constant 0 : index
    %116 = vector.load %arg4[%c0_94, %c3_95, %c0_96, %c0_97] : memref<2x4x2x128xf32, #tpu.memory_space<vmem>>, vector<1x1x2x128xf32>
    %117 = vector.shape_cast %116 : vector<1x1x2x128xf32> to vector<2x128xf32>
    %118 = vector.shape_cast %115 : vector<2x128xf32> to vector<1x1x2x128xf32>
    tpu.vector_store %arg4[%c0_94, %c3_95, %c0_96, %c0_97], %118 {strides = array<i32>} : memref<2x4x2x128xf32, #tpu.memory_space<vmem>>, vector<1x1x2x128xf32>,
    %c0_98 = arith.constant 0 : index
    %c3_99 = arith.constant 3 : index
    %c0_100 = arith.constant 0 : index
    %c0_101 = arith.constant 0 : index
    %119 = vector.load %arg3[%c0_98, %c3_99, %c0_100, %c0_101] : memref<2x4x2x128xf32, #tpu.memory_space<vmem>>, vector<1x1x2x128xf32>
    %120 = vector.shape_cast %119 : vector<1x1x2x128xf32> to vector<2x128xf32>
    %c2_102 = arith.constant 2 : index
    %121 = memref.load %arg1[%c2_102] : memref<4xf32, #tpu.memory_space<smem>>
    %122 = vector.broadcast %121 : f32 to vector<2x128xf32>
    %123 = arith.mulf %120, %122 : vector<2x128xf32>
    %c1_103 = arith.constant 1 : index
    %c3_104 = arith.constant 3 : index
    %c0_105 = arith.constant 0 : index
    %c0_106 = arith.constant 0 : index
    %124 = vector.load %arg3[%c1_103, %c3_104, %c0_105, %c0_106] : memref<2x4x2x128xf32, #tpu.memory_space<vmem>>, vector<1x1x2x128xf32>
    %125 = vector.shape_cast %124 : vector<1x1x2x128xf32> to vector<2x128xf32>
    %c3_107 = arith.constant 3 : index
    %126 = memref.load %arg1[%c3_107] : memref<4xf32, #tpu.memory_space<smem>>
    %127 = vector.broadcast %126 : f32 to vector<2x128xf32>
    %128 = arith.mulf %125, %127 : vector<2x128xf32>
    %129 = arith.addf %123, %128 : vector<2x128xf32>
    %c7 = arith.constant 7 : index
    %130 = memref.load %arg2[%c7] : memref<8xf32, #tpu.memory_space<smem>>
    %131 = vector.broadcast %130 : f32 to vector<2x128xf32>
    %132 = arith.addf %129, %131 : vector<2x128xf32>
    %c1_108 = arith.constant 1 : index
    %c3_109 = arith.constant 3 : index
    %c0_110 = arith.constant 0 : index
    %c0_111 = arith.constant 0 : index
    %133 = vector.load %arg4[%c1_108, %c3_109, %c0_110, %c0_111] : memref<2x4x2x128xf32, #tpu.memory_space<vmem>>, vector<1x1x2x128xf32>
    %134 = vector.shape_cast %133 : vector<1x1x2x128xf32> to vector<2x128xf32>
    %135 = vector.shape_cast %132 : vector<2x128xf32> to vector<1x1x2x128xf32>
    tpu.vector_store %arg4[%c1_108, %c3_109, %c0_110, %c0_111], %135 {strides = array<i32>} : memref<2x4x2x128xf32, #tpu.memory_space<vmem>>, vector<1x1x2x128xf32>,
    return
  }
  func.func @transform_0(%arg0: i32, %arg1: memref<4xf32, #tpu.memory_space<smem>>, %arg2: memref<8xf32, #tpu.memory_space<smem>>) -> (i32, i32, i32, i32) {
    %c0_i32 = arith.constant 0 : i32
    %c0_i32_0 = arith.constant 0 : i32
    %c0_i32_1 = arith.constant 0 : i32
    %c0_i32_2 = arith.constant 0 : i32
    return %c0_i32, %c0_i32_0, %arg0, %c0_i32_1 : i32, i32, i32, i32
  }
  func.func @transform_1(%arg0: i32, %arg1: memref<4xf32, #tpu.memory_space<smem>>, %arg2: memref<8xf32, #tpu.memory_space<smem>>) -> (i32, i32, i32, i32) {
    %c0_i32 = arith.constant 0 : i32
    %c0_i32_0 = arith.constant 0 : i32
    %c0_i32_1 = arith.constant 0 : i32
    %c0_i32_2 = arith.constant 0 : i32
    return %c0_i32, %c0_i32_0, %arg0, %c0_i32_1 : i32, i32, i32, i32
  }
}

</mosaic_0001>

<llo_original>
// kernel: run.1
$region0: #{run.1}
  #allocation0 [shape = 'u32[]', space=smem, size = 0x4, offset = 0x4, fixed_abs, tag = 'smem constant byte address 0x4 - core index']
  #allocation1 [shape = 'u32[144,128]{1,0:T(1,128)}', space=vmem, size = 0x12000, scoped, tag = 'internal scratch']
  #allocation2 [shape = 's32[1]{0}', space=sflag, size = 0x4, scoped, tag = 'scoped memory for run.1']
  #allocation3 [shape = 'u8[512]{0}', space=smem, size = 0x200, scoped, tag = 'prefetched SMEM operand 0']
  #allocation4 [shape = 'u8[512]{0}', space=smem, size = 0x200, scoped, tag = 'prefetched SMEM operand 1']
  %s0 = inlined_call_operand.vmem [shape: f32[4], index: 0, kind: input, shape index: {}]
  %s1 = inlined_call_operand.vmem [shape: f32[8], index: 1, kind: input, shape index: {}]
  %s2 = inlined_call_operand.vmem [shape: f32[2,4,2,128], index: 2, kind: input, shape index: {}]
  %s3 = inlined_call_operand.vmem [shape: f32[2,4,2,128], index: 3, kind: output, shape index: {}]
  %s4 = sld [smem:[#allocation0]]
  $region14: #{run.1} parent=0
    _
  %s6 = ssub.s32 1, %s4
  %s7 = scalar_select 0, %s6, %s4
  %s8 = sshll.u32 %s0, 4
  %s9 = int_to_ptr.vmem [resolvable:$true] %s8
  %11 = dma.vmem_to_smem %s9, 16, [#allocation3], [#allocation2]
  %s12 = sshll.u32 %s1, 4
  %s13 = int_to_ptr.vmem [resolvable:$true] %s12
  %15 = dma.vmem_to_smem %s13, 16, [#allocation4], [#allocation2]
  %16 = dma.done [#allocation2], 32
  %17 = sfence
  // Predicated region
  $region2: #{run.1} parent=0 // pred_check
    _
  $region3: #{run.1} parent=0 // pred_check_branch
    %19 = sbr.rel (0) target = $region5
  $region4: #{run.1} parent=0 // pred_region
    _
  $region5: #{run.1} parent=0 // pred_fallthru
    _
  %v20 = vld [vmem:[%s2] sm:$0x3]
  %s21 = sld [smem:[#allocation3]]
  %v22 = vstv %s21
  %v23 = vmul.f32 %v20, %v22
  %s24 = scalar_lea.vmem %s2, 8
  %v25 = vld [vmem:[%s24] sm:$0x3]
  %s26 = sld [smem:[#allocation3 + $0x1]]
  %v27 = vstv %s26
  %v28 = vmul.f32 %v25, %v27
  %v29 = vadd.f32 %v23, %v28
  %s30 = sld [smem:[#allocation4]]
  %v31 = vstv %s30
  %v32 = vadd.f32 %v29, %v31
  %33 = vst [vmem:[%s3] sm:$0x3] %v32
  %v34 = vld [vmem:[%s2] sm:$0x3]
  %s35 = sld [smem:[#allocation3 + $0x2]]
  %v36 = vstv %s35
  %v37 = vmul.f32 %v34, %v36
  %v38 = vld [vmem:[%s24] sm:$0x3]
  %s39 = sld [smem:[#allocation3 + $0x3]]
  %v40 = vstv %s39
  %v41 = vmul.f32 %v38, %v40
  %v42 = vadd.f32 %v37, %v41
  %s43 = sld [smem:[#allocation4 + $0x4]]
  %v44 = vstv %s43
  %v45 = vadd.f32 %v42, %v44
  %s46 = scalar_lea.vmem %s3, 8
  %47 = vst [vmem:[%s46] sm:$0x3] %v45
  %s48 = scalar_lea.vmem %s2, 2
  %v49 = vld [vmem:[%s48] sm:$0x3]
  %s50 = sld [smem:[#allocation3]]
  %v51 = vstv %s50
  %v52 = vmul.f32 %v49, %v51
  %s53 = scalar_lea.vmem %s2, 10
  %v54 = vld [vmem:[%s53] sm:$0x3]
  %s55 = sld [smem:[#allocation3 + $0x1]]
  %v56 = vstv %s55
  %v57 = vmul.f32 %v54, %v56
  %v58 = vadd.f32 %v52, %v57
  %s59 = sld [smem:[#allocation4 + $0x1]]
  %v60 = vstv %s59
  %v61 = vadd.f32 %v58, %v60
  %s62 = scalar_lea.vmem %s3, 2
  %63 = vst [vmem:[%s62] sm:$0x3] %v61
  %v64 = vld [vmem:[%s48] sm:$0x3]
  %s65 = sld [smem:[#allocation3 + $0x2]]
  %v66 = vstv %s65
  %v67 = vmul.f32 %v64, %v66
  %v68 = vld [vmem:[%s53] sm:$0x3]
  %s69 = sld [smem:[#allocation3 + $0x3]]
  %v70 = vstv %s69
  %v71 = vmul.f32 %v68, %v70
  %v72 = vadd.f32 %v67, %v71
  %s73 = sld [smem:[#allocation4 + $0x5]]
  %v74 = vstv %s73
  %v75 = vadd.f32 %v72, %v74
  %s76 = scalar_lea.vmem %s3, 10
  %77 = vst [vmem:[%s76] sm:$0x3] %v75
  %s78 = scalar_lea.vmem %s2, 4
  %v79 = vld [vmem:[%s78] sm:$0x3]
  %s80 = sld [smem:[#allocation3]]
  %v81 = vstv %s80
  %v82 = vmul.f32 %v79, %v81
  %s83 = scalar_lea.vmem %s2, 12
  %v84 = vld [vmem:[%s83] sm:$0x3]
  %s85 = sld [smem:[#allocation3 + $0x1]]
  %v86 = vstv %s85
  %v87 = vmul.f32 %v84, %v86
  %v88 = vadd.f32 %v82, %v87
  %s89 = sld [smem:[#allocation4 + $0x2]]
  %v90 = vstv %s89
  %v91 = vadd.f32 %v88, %v90
  %s92 = scalar_lea.vmem %s3, 4
  %93 = vst [vmem:[%s92] sm:$0x3] %v91
  %v94 = vld [vmem:[%s78] sm:$0x3]
  %s95 = sld [smem:[#allocation3 + $0x2]]
  %v96 = vstv %s95
  %v97 = vmul.f32 %v94, %v96
  %v98 = vld [vmem:[%s83] sm:$0x3]
  %s99 = sld [smem:[#allocation3 + $0x3]]
  %v100 = vstv %s99
  %v101 = vmul.f32 %v98, %v100
  %v102 = vadd.f32 %v97, %v101
  %s103 = sld [smem:[#allocation4 + $0x6]]
  %v104 = vstv %s103
  %v105 = vadd.f32 %v102, %v104
  %s106 = scalar_lea.vmem %s3, 12
  %107 = vst [vmem:[%s106] sm:$0x3] %v105
  %s108 = scalar_lea.vmem %s2, 6
  %v109 = vld [vmem:[%s108] sm:$0x3]
  %s110 = sld [smem:[#allocation3]]
  %v111 = vstv %s110
  %v112 = vmul.f32 %v109, %v111
  %s113 = scalar_lea.vmem %s2, 14
  %v114 = vld [vmem:[%s113] sm:$0x3]
  %s115 = sld [smem:[#allocation3 + $0x1]]
  %v116 = vstv %s115
  %v117 = vmul.f32 %v114, %v116
  %v118 = vadd.f32 %v112, %v117
  %s119 = sld [smem:[#allocation4 + $0x3]]
  %v120 = vstv %s119
  %v121 = vadd.f32 %v118, %v120
  %s122 = scalar_lea.vmem %s3, 6
  %123 = vst [vmem:[%s122] sm:$0x3] %v121
  %v124 = vld [vmem:[%s108] sm:$0x3]
  %s125 = sld [smem:[#allocation3 + $0x2]]
  %v126 = vstv %s125
  %v127 = vmul.f32 %v124, %v126
  %v128 = vld [vmem:[%s113] sm:$0x3]
  %s129 = sld [smem:[#allocation3 + $0x3]]
  %v130 = vstv %s129
  %v131 = vmul.f32 %v128, %v130
  %v132 = vadd.f32 %v127, %v131
  %s133 = sld [smem:[#allocation4 + $0x7]]
  %v134 = vstv %s133
  %v135 = vadd.f32 %v132, %v134
  %s136 = scalar_lea.vmem %s3, 14
  %137 = vst [vmem:[%s136] sm:$0x3] %v135
  // Predicated region
  $region6: #{run.1} parent=0 // pred_check
    _
  $region7: #{run.1} parent=0 // pred_check_branch
    %139 = sbr.rel (0) target = $region9
  $region8: #{run.1} parent=0 // pred_region
    _
  $region9: #{run.1} parent=0 // pred_fallthru
    _
  // Predicated region
  $region10: #{run.1} parent=0 // pred_check
    _
  $region11: #{run.1} parent=0 // pred_check_branch
    %141 = sbr.rel (0) target = $region13
  $region12: #{run.1} parent=0 // pred_region
    _
  $region13: #{run.1} parent=0 // pred_fallthru
    _

</llo_original>
